<compile_context>
chip_gen: v5e
topology: v5e:2x2
jax: 0.10.0
libtpu: 0.0.40
codegen_flags: <defaults>
</compile_context>

<pallas_src>
import functools

import jax
import jax.numpy as jnp
import numpy as np
from jax.experimental import pallas as pl
from jax.experimental.pallas import tpu as pltpu

_ROWS = 8             # sublane dim of every block (full f32 vreg sublanes)
_CHUNK = 2048         # lanes per in-kernel compute chunk (16 vregs / value)
_BK_MAX = 64 * 1024   # lanes per DMA block: 2 MiB f32 per input per buffer


def _bce_kernel(p_ref, t_ref, o_ref, acc_sc, *, total, cols, bk, chunk):
    rows = _ROWS
    k = pl.program_id(1)

    @pl.when(k == 0)
    def _init():
        acc_sc[...] = jnp.zeros_like(acc_sc)

    # Element offset (along the padded column axis) of this block's first lane.
    col_base = (pl.program_id(0) * pl.num_programs(1) + k) * bk

    # Loop-invariant flat-index base for the padding mask (hoisted once).
    # NOTE: int32 flat indices -> supports up to ~2.1e9 total elements.
    row_iota = jax.lax.broadcasted_iota(jnp.int32, (rows, chunk), 0)
    lane_iota = jax.lax.broadcasted_iota(jnp.int32, (rows, chunk), 1)
    flat_base = row_iota * cols + lane_iota              # (rows, chunk) int32

    acc = jnp.zeros((rows, chunk), jnp.float32)
    for j in range(bk // chunk):                         # static, fully unrolled
        lo, hi = j * chunk, (j + 1) * chunk
        x = p_ref[:, lo:hi].astype(jnp.float32)
        y = t_ref[:, lo:hi].astype(jnp.float32)
        # BCE-with-logits, stable form (== torch.nn.BCEWithLogitsLoss).
        loss = jnp.maximum(x, 0.0) - x * y + jnp.log1p(jnp.exp(-jnp.abs(x)))
        # Zero out padded elements: real elements have flat index < total.
        limit = total - (col_base + lo)                  # traced scalar
        acc = acc + jnp.where(flat_base < limit, loss, 0.0)

    # Single deferred cross-lane reduction per grid step.
    acc_sc[...] += jnp.sum(acc, axis=-1, keepdims=True)

    @pl.when(k == pl.num_programs(1) - 1)
    def _finalize():
        # Per-sublane-row partial sums of this group, lane-broadcast into a
        # lane-dense (8, 128) output block; the wrapper finishes the reduce.
        o_ref[...] = jnp.broadcast_to(acc_sc[...], (rows, 128)).astype(o_ref.dtype)


def domain_bce_loss(predict, target):
    """Pallas implementation of DomainBCELoss.forward."""
    assert predict.shape == target.shape, "predict & target shape do not match"
    batch = predict.shape[0]
    total = int(np.prod(predict.shape))

    rows, chunk = _ROWS, _CHUNK
    cols_needed = pl.cdiv(total, rows)
    bk = int(min(_BK_MAX, ((cols_needed + chunk - 1) // chunk) * chunk))
    num_blocks = int(pl.cdiv(cols_needed, bk))
    num_groups = 2 if num_blocks >= 2 else 1   # 'parallel' split (both TCs on v7x)
    num_k = int(pl.cdiv(num_blocks, num_groups))
    cols = num_groups * num_k * bk

    def _prep(a):
        flat = jnp.reshape(a, (total,))        # layout-preserving flatten
        pad = rows * cols - total
        if pad:                                # only copies when padding is needed
            flat = jnp.pad(flat, (0, pad))
        return jnp.reshape(flat, (rows, cols))  # native dtype: no wrapper upcast

    p2 = _prep(predict)
    t2 = _prep(target)

    kernel = functools.partial(_bce_kernel, total=total, cols=cols, bk=bk, chunk=chunk)

    out = pl.pallas_call(
        kernel,
        out_shape=jax.ShapeDtypeStruct((num_groups, rows, 128), jnp.float32),
        grid_spec=pltpu.PrefetchScalarGridSpec(
            num_scalar_prefetch=0,
            grid=(num_groups, num_k),
            in_specs=[
                pl.BlockSpec((rows, bk), lambda g, k: (0, g * num_k + k)),
                pl.BlockSpec((rows, bk), lambda g, k: (0, g * num_k + k)),
            ],
            out_specs=pl.BlockSpec((None, rows, 128), lambda g, k: (g, 0, 0)),
            scratch_shapes=[pltpu.VMEM((rows, 1), jnp.float32)],
        ),
        compiler_params=pltpu.CompilerParams(
            dimension_semantics=("parallel", "arbitrary"),
            vmem_limit_bytes=32 * 1024 * 1024,
        ),
    )(p2, t2)

    # out[g, r, :] holds the per-(group, sublane-row) partial sum (broadcast
    # across lanes); the remaining tiny reduction + batch normalisation is JAX.
    return jnp.sum(out[:, :, 0]) / batch


def _reference(predict, target):
    """Pure-JAX reference matching torch BCEWithLogitsLoss(reduction='none').sum()/N."""
    x = predict.astype(jnp.float32)
    y = target.astype(jnp.float32)
    loss = jnp.maximum(x, 0.0) - x * y + jnp.log1p(jnp.exp(-jnp.abs(x)))
    return jnp.sum(loss) / predict.shape[0]


if __name__ == "__main__":
    key = jax.random.PRNGKey(0)
    k1, k2, k3, k4 = jax.random.split(key, 4)

    loss_fn = jax.jit(domain_bce_loss)

    # Typical NCHW logits with {0, 1} targets.
    N, C, H, W = 2, 4, 16, 16
    predict = jax.random.normal(k1, (N, C, H, W), dtype=jnp.float32)
    target = jax.random.bernoulli(k2, 0.3, (N, C, H, W)).astype(jnp.float32)

    loss = jax.block_until_ready(loss_fn(predict, target))
    ref = _reference(predict, target)
    np.testing.assert_allclose(np.asarray(loss), np.asarray(ref), rtol=5e-5, atol=1e-4)

    # Awkward (non-128-multiple) shape to exercise the padding / mask path.
    predict2 = jax.random.normal(k3, (3, 5, 7), dtype=jnp.float32)
    target2 = jax.random.bernoulli(k4, 0.5, (3, 5, 7)).astype(jnp.float32)
    loss2 = jax.block_until_ready(loss_fn(predict2, target2))
    ref2 = _reference(predict2, target2)
    np.testing.assert_allclose(np.asarray(loss2), np.asarray(ref2), rtol=5e-5, atol=1e-4)

    print("KERNEL_OK")
</pallas_src>

<mosaic_0001>
module attributes {stable_mosaic.version = 11 : i64} {
  func.func @_bce_kernel(%arg0: i32, %arg1: i32, %arg2: memref<8x2048xf32, #tpu.memory_space<vmem>>, %arg3: memref<8x2048xf32, #tpu.memory_space<vmem>>, %arg4: memref<1x8x128xf32, #tpu.memory_space<vmem>>, %arg5: memref<8x1xf32, #tpu.memory_space<vmem>>) attributes {dimension_semantics = [#tpu.dimension_semantics<parallel>, #tpu.dimension_semantics<arbitrary>], iteration_bounds = array<i64: 1, 1>, scalar_prefetch = 0 : i64, scratch_operands = 1 : i64, tpu.core_type = #tpu.core_type<tc>, window_params = [{transform_indices = @transform_0, window_bounds = array<i64: 8, 2048>}, {transform_indices = @transform_1, window_bounds = array<i64: 8, 2048>}, {transform_indices = @transform_2, window_bounds = array<i64: 1, 8, 128>}]} {
    %c0_i32 = arith.constant 0 : i32
    %0 = arith.cmpi eq, %arg1, %c0_i32 : i32
    %1 = arith.extui %0 : i1 to i32
    %c0_i32_0 = arith.constant 0 : i32
    %2 = arith.cmpi ne, %1, %c0_i32_0 : i32
    scf.if %2 {
      %cst_17 = arith.constant 0.000000e+00 : f32
      %39 = vector.broadcast %cst_17 : f32 to vector<8x1xf32>
      %c0_18 = arith.constant 0 : index
      %c0_19 = arith.constant 0 : index
      %40 = vector.load %arg5[%c0_18, %c0_19] : memref<8x1xf32, #tpu.memory_space<vmem>>, vector<8x1xf32>
      tpu.vector_store %arg5[%c0_18, %c0_19], %39 {strides = array<i32>} : memref<8x1xf32, #tpu.memory_space<vmem>>, vector<8x1xf32>,
    } else {
    }
    %c1_i32 = arith.constant 1 : i32
    %3 = arith.muli %arg0, %c1_i32 : i32
    %4 = arith.addi %3, %arg1 : i32
    %c2048_i32 = arith.constant 2048 : i32
    %5 = arith.muli %4, %c2048_i32 : i32
    %6 = tpu.iota {dimensions = array<i32: 0>} : vector<8x2048xi32>
    %7 = tpu.iota {dimensions = array<i32: 1>} : vector<8x2048xi32>
    %c2048_i32_1 = arith.constant 2048 : i32
    %8 = vector.broadcast %c2048_i32_1 : i32 to vector<8x2048xi32>
    %9 = arith.muli %6, %8 : vector<8x2048xi32>
    %10 = arith.addi %9, %7 : vector<8x2048xi32>
    %cst = arith.constant 0.000000e+00 : f32
    %11 = vector.broadcast %cst : f32 to vector<8x2048xf32>
    %c0 = arith.constant 0 : index
    %c0_2 = arith.constant 0 : index
    %12 = vector.load %arg2[%c0, %c0_2] : memref<8x2048xf32, #tpu.memory_space<vmem>>, vector<8x2048xf32>
    %c0_3 = arith.constant 0 : index
    %c0_4 = arith.constant 0 : index
    %13 = vector.load %arg3[%c0_3, %c0_4] : memref<8x2048xf32, #tpu.memory_space<vmem>>, vector<8x2048xf32>
    %cst_5 = arith.constant 0.000000e+00 : f32
    %14 = vector.broadcast %cst_5 : f32 to vector<8x2048xf32>
    %15 = arith.maximumf %12, %14 : vector<8x2048xf32>
    %16 = arith.mulf %12, %13 : vector<8x2048xf32>
    %17 = arith.subf %15, %16 : vector<8x2048xf32>
    %18 = math.absf %12 : vector<8x2048xf32>
    %cst_6 = arith.constant 0.000000e+00 : f32
    %19 = vector.broadcast %cst_6 : f32 to vector<8x2048xf32>
    %20 = arith.subf %19, %18 : vector<8x2048xf32>
    %21 = math.exp %20 : vector<8x2048xf32>
    %22 = math.log1p %21 : vector<8x2048xf32>
    %23 = arith.addf %17, %22 : vector<8x2048xf32>
    %c0_i32_7 = arith.constant 0 : i32
    %24 = arith.addi %5, %c0_i32_7 : i32
    %c2048_i32_8 = arith.constant 2048 : i32
    %25 = arith.subi %c2048_i32_8, %24 : i32
    %26 = vector.broadcast %25 : i32 to vector<8x2048xi32>
    %27 = arith.cmpi slt, %10, %26 : vector<8x2048xi32>
    %cst_9 = arith.constant 0.000000e+00 : f32
    %28 = vector.broadcast %cst_9 : f32 to vector<8x2048xf32>
    %29 = arith.select %27, %23, %28 : vector<8x2048xi1>, vector<8x2048xf32>
    %30 = arith.addf %11, %29 : vector<8x2048xf32>
    %c0_10 = arith.constant 0 : index
    %c0_11 = arith.constant 0 : index
    %31 = vector.load %arg5[%c0_10, %c0_11] : memref<8x1xf32, #tpu.memory_space<vmem>>, vector<8x1xf32>
    %cst_12 = arith.constant dense<0.000000e+00> : vector<8xf32>
    %32 = vector.multi_reduction <add>, %30, %cst_12 [1] : vector<8x2048xf32> to vector<8xf32>
    %33 = vector.shape_cast %32 : vector<8xf32> to vector<8x1xf32>
    %34 = arith.addf %31, %33 : vector<8x1xf32>
    %c0_13 = arith.constant 0 : index
    %c0_14 = arith.constant 0 : index
    %35 = vector.load %arg5[%c0_13, %c0_14] : memref<8x1xf32, #tpu.memory_space<vmem>>, vector<8x1xf32>
    tpu.vector_store %arg5[%c0_13, %c0_14], %34 {strides = array<i32>} : memref<8x1xf32, #tpu.memory_space<vmem>>, vector<8x1xf32>,
    %c0_i32_15 = arith.constant 0 : i32
    %36 = arith.cmpi eq, %arg1, %c0_i32_15 : i32
    %37 = arith.extui %36 : i1 to i32
    %c0_i32_16 = arith.constant 0 : i32
    %38 = arith.cmpi ne, %37, %c0_i32_16 : i32
    scf.if %38 {
      %c0_17 = arith.constant 0 : index
      %c0_18 = arith.constant 0 : index
      %39 = vector.load %arg5[%c0_17, %c0_18] : memref<8x1xf32, #tpu.memory_space<vmem>>, vector<8x1xf32>
      %40 = vector.shape_cast %39 : vector<8x1xf32> to vector<8x1xf32>
      %41 = vector.broadcast %40 : vector<8x1xf32> to vector<8x128xf32>
      %c0_19 = arith.constant 0 : index
      %c0_20 = arith.constant 0 : index
      %c0_21 = arith.constant 0 : index
      %42 = vector.load %arg4[%c0_19, %c0_20, %c0_21] : memref<1x8x128xf32, #tpu.memory_space<vmem>>, vector<1x8x128xf32>
      %43 = vector.shape_cast %42 : vector<1x8x128xf32> to vector<8x128xf32>
      %44 = vector.shape_cast %41 : vector<8x128xf32> to vector<1x8x128xf32>
      tpu.vector_store %arg4[%c0_19, %c0_20, %c0_21], %44 {strides = array<i32>} : memref<1x8x128xf32, #tpu.memory_space<vmem>>, vector<1x8x128xf32>,
    } else {
    }
    return
  }
  func.func @transform_0(%arg0: i32, %arg1: i32) -> (i32, i32) {
    %c1_i32 = arith.constant 1 : i32
    %0 = arith.muli %arg0, %c1_i32 : i32
    %1 = arith.addi %0, %arg1 : i32
    %c0_i32 = arith.constant 0 : i32
    %c0_i32_0 = arith.constant 0 : i32
    return %c0_i32, %1 : i32, i32
  }
  func.func @transform_1(%arg0: i32, %arg1: i32) -> (i32, i32) {
    %c1_i32 = arith.constant 1 : i32
    %0 = arith.muli %arg0, %c1_i32 : i32
    %1 = arith.addi %0, %arg1 : i32
    %c0_i32 = arith.constant 0 : i32
    %c0_i32_0 = arith.constant 0 : i32
    return %c0_i32, %1 : i32, i32
  }
  func.func @transform_2(%arg0: i32, %arg1: i32) -> (i32, i32, i32) {
    %c0_i32 = arith.constant 0 : i32
    %c0_i32_0 = arith.constant 0 : i32
    %c0_i32_1 = arith.constant 0 : i32
    return %arg0, %c0_i32, %c0_i32_0 : i32, i32, i32
  }
}

</mosaic_0001>

<llo_original>
// kernel: domain_bce_loss.1
$region0: #{domain_bce_loss.1}
  #allocation0 [shape = 'u32[]', space=smem, size = 0x4, offset = 0x4, fixed_abs, tag = 'smem constant byte address 0x4 - core index']
  #allocation1 [shape = 'u32[72,128]{1,0:T(1,128)}', space=vmem, size = 0x9000, scoped, tag = 'internal scratch']
  #allocation2 [shape = 'f32[8,1]{1,0:T(8,128)}', space=vmem, size = 0x1000, scoped, tag = 'scratch operand']
  %s0 = inlined_call_operand.vmem [shape: f32[8,2048], index: 0, kind: input, shape index: {}]
  %s1 = inlined_call_operand.vmem [shape: f32[8,2048], index: 1, kind: input, shape index: {}]
  %s2 = inlined_call_operand.vmem [shape: f32[1,8,128], index: 2, kind: output, shape index: {}]
  %s3 = sld [smem:[#allocation0]]
  $region26: #{domain_bce_loss.1} parent=0
    _
  %s5 = ssub.s32 1, %s3
  %s6 = scalar_select 0, %s5, %s3
  // Predicated region
  $region2: #{domain_bce_loss.1} parent=0 // pred_check
    _
  $region3: #{domain_bce_loss.1} parent=0 // pred_check_branch
    %8 = sbr.rel (0) target = $region5
  $region4: #{domain_bce_loss.1} parent=0 // pred_region
    %s9 = sadd.s32 0, 0
    %s10 = smul.u32 16, %s9
    %p11 = scmp.lt.s32.totalorder %s10, 15
    %s12 = scalar_select %p11, %s10, 15
    %s13 = smul.addr %s12, 8
    %s14 = scalar_lea.vmem %s0, %s13
    %s15 = sadd.s32 0, 0
    %s16 = smul.u32 16, %s15
  $region5: #{domain_bce_loss.1} parent=0 // pred_fallthru
    _
  // Predicated region
  $region6: #{domain_bce_loss.1} parent=0 // pred_check
    _
  $region7: #{domain_bce_loss.1} parent=0 // pred_check_branch
    %18 = sbr.rel (0) target = $region9
  $region8: #{domain_bce_loss.1} parent=0 // pred_region
    %s19 = sadd.s32 0, 0
    %s20 = smul.u32 16, %s19
    %p21 = scmp.lt.s32.totalorder %s20, 15
    %s22 = scalar_select %p21, %s20, 15
    %s23 = smul.addr %s22, 8
    %s24 = scalar_lea.vmem %s1, %s23
    %s25 = sadd.s32 0, 0
    %s26 = smul.u32 16, %s25
  $region9: #{domain_bce_loss.1} parent=0 // pred_fallthru
    _
  %s27 = sadd.s32 0, 0
  %s28 = smul.u32 16, %s27
  %p29 = scmp.lt.s32.totalorder %s28, 15
  %s30 = scalar_select %p29, %s28, 15
  %s31 = smul.addr %s30, 8
  %s32 = scalar_lea.vmem %s0, %s31
  %s33 = sadd.s32 0, 0
  %s34 = smul.u32 16, %s33
  %p35 = scmp.lt.s32.totalorder %s34, 15
  %s36 = scalar_select %p35, %s34, 15
  %s37 = smul.addr %s36, 8
  %s38 = scalar_lea.vmem %s1, %s37
  %s39 = sadd.s32 0, 0
  %s40 = smul.u32 16, %s39
  %p41 = scmp.lt.s32.totalorder %s40, 15
  %s42 = scalar_select %p41, %s40, 15
  %s43 = smul.addr %s42, 8
  %s44 = scalar_lea.vmem %s0, %s43
  %s45 = sadd.s32 0, 0
  %s46 = smul.u32 16, %s45
  %s47 = sadd.s32 0, 0
  %s48 = smul.u32 16, %s47
  %p49 = scmp.lt.s32.totalorder %s48, 15
  %s50 = scalar_select %p49, %s48, 15
  %s51 = smul.addr %s50, 8
  %s52 = scalar_lea.vmem %s1, %s51
  %s53 = sadd.s32 0, 0
  %s54 = smul.u32 16, %s53
  %p55 = scmp.eq.s32.totalorder 0, 0
  // Predicated region
  $region10: #{domain_bce_loss.1} parent=0 // pred_check
    %p56 = pneg %p55
  $region11: #{domain_bce_loss.1} parent=0 // pred_check_branch
    %58 = sbr.rel (%p56) target = $region13
  $region12: #{domain_bce_loss.1} parent=0 // pred_region
    %vm59 = vcmask 7168
    %60 = vst.msk [vmem:[#allocation2] sm:$0xff] %vm59, 0.0
  $region13: #{domain_bce_loss.1} parent=0 // pred_fallthru
    _
  %s61 = sadd.s32 0, 0
  %s62 = smul.u32 %s61, 2048
  %v63 = vlaneseq
  %v64 = vshrl.u32 %v63, 7
  %v65 = vlaneseq
  %v66 = vand.u32 %v65, 127
  %v67 = vadd.s32 %v66, 128
  %v68 = vadd.s32 %v66, 256
  %v69 = vadd.s32 %v66, 384
  %v70 = vadd.s32 %v66, 512
  %v71 = vadd.s32 %v66, 640
  %v72 = vadd.s32 %v66, 768
  %v73 = vadd.s32 %v66, 896
  %v74 = vadd.s32 %v66, 1024
  %v75 = vadd.s32 %v66, 1152
  %v76 = vadd.s32 %v66, 1280
  %v77 = vadd.s32 %v66, 1408
  %v78 = vadd.s32 %v66, 1536
  %v79 = vadd.s32 %v66, 1664
  %v80 = vadd.s32 %v66, 1792
  %v81 = vadd.s32 %v66, 1920
  %v82 = vmul.u32 %v64, 2048
  %v83 = vadd.s32 %v82, %v66
  %v84 = vadd.s32 %v82, %v67
  %v85 = vadd.s32 %v82, %v68
  %v86 = vadd.s32 %v82, %v69
  %v87 = vadd.s32 %v82, %v70
  %v88 = vadd.s32 %v82, %v71
  %v89 = vadd.s32 %v82, %v72
  %v90 = vadd.s32 %v82, %v73
  %v91 = vadd.s32 %v82, %v74
  %v92 = vadd.s32 %v82, %v75
  %v93 = vadd.s32 %v82, %v76
  %v94 = vadd.s32 %v82, %v77
  %v95 = vadd.s32 %v82, %v78
  %v96 = vadd.s32 %v82, %v79
  %v97 = vadd.s32 %v82, %v80
  %v98 = vadd.s32 %v82, %v81
  %v99 = vld [vmem:[%s44] sm:$0xff]
  %v100 = vld [vmem:[%s44 + $0x8] sm:$0xff]
  %v101 = vld [vmem:[%s44 + $0x10] sm:$0xff]
  %v102 = vld [vmem:[%s44 + $0x18] sm:$0xff]
  %v103 = vld [vmem:[%s44 + $0x20] sm:$0xff]
  %v104 = vld [vmem:[%s44 + $0x28] sm:$0xff]
  %v105 = vld [vmem:[%s44 + $0x30] sm:$0xff]
  %v106 = vld [vmem:[%s44 + $0x38] sm:$0xff]
  %v107 = vld [vmem:[%s44 + $0x40] sm:$0xff]
  %v108 = vld [vmem:[%s44 + $0x48] sm:$0xff]
  %v109 = vld [vmem:[%s44 + $0x50] sm:$0xff]
  %v110 = vld [vmem:[%s44 + $0x58] sm:$0xff]
  %v111 = vld [vmem:[%s44 + $0x60] sm:$0xff]
  %v112 = vld [vmem:[%s44 + $0x68] sm:$0xff]
  %v113 = vld [vmem:[%s44 + $0x70] sm:$0xff]
  %v114 = vld [vmem:[%s44 + $0x78] sm:$0xff]
  %v115 = vld [vmem:[%s52] sm:$0xff]
  %v116 = vld [vmem:[%s52 + $0x8] sm:$0xff]
  %v117 = vld [vmem:[%s52 + $0x10] sm:$0xff]
  %v118 = vld [vmem:[%s52 + $0x18] sm:$0xff]
  %v119 = vld [vmem:[%s52 + $0x20] sm:$0xff]
  %v120 = vld [vmem:[%s52 + $0x28] sm:$0xff]
  %v121 = vld [vmem:[%s52 + $0x30] sm:$0xff]
  %v122 = vld [vmem:[%s52 + $0x38] sm:$0xff]
  %v123 = vld [vmem:[%s52 + $0x40] sm:$0xff]
  %v124 = vld [vmem:[%s52 + $0x48] sm:$0xff]
  %v125 = vld [vmem:[%s52 + $0x50] sm:$0xff]
  %v126 = vld [vmem:[%s52 + $0x58] sm:$0xff]
  %v127 = vld [vmem:[%s52 + $0x60] sm:$0xff]
  %v128 = vld [vmem:[%s52 + $0x68] sm:$0xff]
  %v129 = vld [vmem:[%s52 + $0x70] sm:$0xff]
  %v130 = vld [vmem:[%s52 + $0x78] sm:$0xff]
  %v131 = vmax.f32 %v99, 0.0
  %v132 = vmax.f32 %v100, 0.0
  %v133 = vmax.f32 %v101, 0.0
  %v134 = vmax.f32 %v102, 0.0
  %v135 = vmax.f32 %v103, 0.0
  %v136 = vmax.f32 %v104, 0.0
  %v137 = vmax.f32 %v105, 0.0
  %v138 = vmax.f32 %v106, 0.0
  %v139 = vmax.f32 %v107, 0.0
  %v140 = vmax.f32 %v108, 0.0
  %v141 = vmax.f32 %v109, 0.0
  %v142 = vmax.f32 %v110, 0.0
  %v143 = vmax.f32 %v111, 0.0
  %v144 = vmax.f32 %v112, 0.0
  %v145 = vmax.f32 %v113, 0.0
  %v146 = vmax.f32 %v114, 0.0
  %v147 = vmul.f32 %v99, %v115
  %v148 = vmul.f32 %v100, %v116
  %v149 = vmul.f32 %v101, %v117
  %v150 = vmul.f32 %v102, %v118
  %v151 = vmul.f32 %v103, %v119
  %v152 = vmul.f32 %v104, %v120
  %v153 = vmul.f32 %v105, %v121
  %v154 = vmul.f32 %v106, %v122
  %v155 = vmul.f32 %v107, %v123
  %v156 = vmul.f32 %v108, %v124
  %v157 = vmul.f32 %v109, %v125
  %v158 = vmul.f32 %v110, %v126
  %v159 = vmul.f32 %v111, %v127
  %v160 = vmul.f32 %v112, %v128
  %v161 = vmul.f32 %v113, %v129
  %v162 = vmul.f32 %v114, %v130
  %v163 = vsub.f32 %v131, %v147
  %v164 = vsub.f32 %v132, %v148
  %v165 = vsub.f32 %v133, %v149
  %v166 = vsub.f32 %v134, %v150
  %v167 = vsub.f32 %v135, %v151
  %v168 = vsub.f32 %v136, %v152
  %v169 = vsub.f32 %v137, %v153
  %v170 = vsub.f32 %v138, %v154
  %v171 = vsub.f32 %v139, %v155
  %v172 = vsub.f32 %v140, %v156
  %v173 = vsub.f32 %v141, %v157
  %v174 = vsub.f32 %v142, %v158
  %v175 = vsub.f32 %v143, %v159
  %v176 = vsub.f32 %v144, %v160
  %v177 = vsub.f32 %v145, %v161
  %v178 = vsub.f32 %v146, %v162
  %v179 = vand.u32 2147483647, %v99
  %v180 = vand.u32 2147483647, %v100
  %v181 = vand.u32 2147483647, %v101
  %v182 = vand.u32 2147483647, %v102
  %v183 = vand.u32 2147483647, %v103
  %v184 = vand.u32 2147483647, %v104
  %v185 = vand.u32 2147483647, %v105
  %v186 = vand.u32 2147483647, %v106
  %v187 = vand.u32 2147483647, %v107
  %v188 = vand.u32 2147483647, %v108
  %v189 = vand.u32 2147483647, %v109
  %v190 = vand.u32 2147483647, %v110
  %v191 = vand.u32 2147483647, %v111
  %v192 = vand.u32 2147483647, %v112
  %v193 = vand.u32 2147483647, %v113
  %v194 = vand.u32 2147483647, %v114
  %v195 = vsub.f32 0.0, %v179
  %v196 = vsub.f32 0.0, %v180
  %v197 = vsub.f32 0.0, %v181
  %v198 = vsub.f32 0.0, %v182
  %v199 = vsub.f32 0.0, %v183
  %v200 = vsub.f32 0.0, %v184
  %v201 = vsub.f32 0.0, %v185
  %v202 = vsub.f32 0.0, %v186
  %v203 = vsub.f32 0.0, %v187
  %v204 = vsub.f32 0.0, %v188
  %v205 = vsub.f32 0.0, %v189
  %v206 = vsub.f32 0.0, %v190
  %v207 = vsub.f32 0.0, %v191
  %v208 = vsub.f32 0.0, %v192
  %v209 = vsub.f32 0.0, %v193
  %v210 = vsub.f32 0.0, %v194
  %v211 = vmul.f32 %v195, 1.442695
  %v212 = vpow.pop %v211
  %v213 = vmul.f32 %v196, 1.442695
  %v214 = vpow.pop %v213
  %v215 = vmul.f32 %v197, 1.442695
  %v216 = vpow.pop %v215
  %v217 = vmul.f32 %v198, 1.442695
  %v218 = vpow.pop %v217
  %v219 = vmul.f32 %v199, 1.442695
  %v220 = vpow.pop %v219
  %v221 = vmul.f32 %v200, 1.442695
  %v222 = vpow.pop %v221
  %v223 = vmul.f32 %v201, 1.442695
  %v224 = vpow.pop %v223
  %v225 = vmul.f32 %v202, 1.442695
  %v226 = vpow.pop %v225
  %v227 = vmul.f32 %v203, 1.442695
  %v228 = vpow.pop %v227
  %v229 = vmul.f32 %v204, 1.442695
  %v230 = vpow.pop %v229
  %v231 = vmul.f32 %v205, 1.442695
  %v232 = vpow.pop %v231
  %v233 = vmul.f32 %v206, 1.442695
  %v234 = vpow.pop %v233
  %v235 = vmul.f32 %v207, 1.442695
  %v236 = vpow.pop %v235
  %v237 = vmul.f32 %v208, 1.442695
  %v238 = vpow.pop %v237
  %v239 = vmul.f32 %v209, 1.442695
  %v240 = vpow.pop %v239
  %v241 = vmul.f32 %v210, 1.442695
  %v242 = vpow.pop %v241
  %v243 = vadd.f32 %v212, 1.0
  %v244 = vlog2.pop %v243
  %v245 = vmul.f32 %v244, 0.6931472
  %v246 = vmul.f32 -0.5, %v212
  %v247 = vadd.f32 %v246, 1.0
  %v248 = vmul.f32 %v247, %v212
  %v249 = vand.u32 2147483647, %v212
  %vm250 = vcmp.lt.f32.partialorder %v249, 0.0004427343
  %v251 = vsel %vm250, %v248, %v245
  %v252 = vadd.f32 %v214, 1.0
  %v253 = vlog2.pop %v252
  %v254 = vmul.f32 %v253, 0.6931472
  %v255 = vmul.f32 -0.5, %v214
  %v256 = vadd.f32 %v255, 1.0
  %v257 = vmul.f32 %v256, %v214
  %v258 = vand.u32 2147483647, %v214
  %vm259 = vcmp.lt.f32.partialorder %v258, 0.0004427343
  %v260 = vsel %vm259, %v257, %v254
  %v261 = vadd.f32 %v216, 1.0
  %v262 = vlog2.pop %v261
  %v263 = vmul.f32 %v262, 0.6931472
  %v264 = vmul.f32 -0.5, %v216
  %v265 = vadd.f32 %v264, 1.0
  %v266 = vmul.f32 %v265, %v216
  %v267 = vand.u32 2147483647, %v216
  %vm268 = vcmp.lt.f32.partialorder %v267, 0.0004427343
  %v269 = vsel %vm268, %v266, %v263
  %v270 = vadd.f32 %v218, 1.0
  %v271 = vlog2.pop %v270
  %v272 = vmul.f32 %v271, 0.6931472
  %v273 = vmul.f32 -0.5, %v218
  %v274 = vadd.f32 %v273, 1.0
  %v275 = vmul.f32 %v274, %v218
  %v276 = vand.u32 2147483647, %v218
  %vm277 = vcmp.lt.f32.partialorder %v276, 0.0004427343
  %v278 = vsel %vm277, %v275, %v272
  %v279 = vadd.f32 %v220, 1.0
  %v280 = vlog2.pop %v279
  %v281 = vmul.f32 %v280, 0.6931472
  %v282 = vmul.f32 -0.5, %v220
  %v283 = vadd.f32 %v282, 1.0
  %v284 = vmul.f32 %v283, %v220
  %v285 = vand.u32 2147483647, %v220
  %vm286 = vcmp.lt.f32.partialorder %v285, 0.0004427343
  %v287 = vsel %vm286, %v284, %v281
  %v288 = vadd.f32 %v222, 1.0
  %v289 = vlog2.pop %v288
  %v290 = vmul.f32 %v289, 0.6931472
  %v291 = vmul.f32 -0.5, %v222
  %v292 = vadd.f32 %v291, 1.0
  %v293 = vmul.f32 %v292, %v222
  %v294 = vand.u32 2147483647, %v222
  %vm295 = vcmp.lt.f32.partialorder %v294, 0.0004427343
  %v296 = vsel %vm295, %v293, %v290
  %v297 = vadd.f32 %v224, 1.0
  %v298 = vlog2.pop %v297
  %v299 = vmul.f32 %v298, 0.6931472
  %v300 = vmul.f32 -0.5, %v224
  %v301 = vadd.f32 %v300, 1.0
  %v302 = vmul.f32 %v301, %v224
  %v303 = vand.u32 2147483647, %v224
  %vm304 = vcmp.lt.f32.partialorder %v303, 0.0004427343
  %v305 = vsel %vm304, %v302, %v299
  %v306 = vadd.f32 %v226, 1.0
  %v307 = vlog2.pop %v306
  %v308 = vmul.f32 %v307, 0.6931472
  %v309 = vmul.f32 -0.5, %v226
  %v310 = vadd.f32 %v309, 1.0
  %v311 = vmul.f32 %v310, %v226
  %v312 = vand.u32 2147483647, %v226
  %vm313 = vcmp.lt.f32.partialorder %v312, 0.0004427343
  %v314 = vsel %vm313, %v311, %v308
  %v315 = vadd.f32 %v228, 1.0
  %v316 = vlog2.pop %v315
  %v317 = vmul.f32 %v316, 0.6931472
  %v318 = vmul.f32 -0.5, %v228
  %v319 = vadd.f32 %v318, 1.0
  %v320 = vmul.f32 %v319, %v228
  %v321 = vand.u32 2147483647, %v228
  %vm322 = vcmp.lt.f32.partialorder %v321, 0.0004427343
  %v323 = vsel %vm322, %v320, %v317
  %v324 = vadd.f32 %v230, 1.0
  %v325 = vlog2.pop %v324
  %v326 = vmul.f32 %v325, 0.6931472
  %v327 = vmul.f32 -0.5, %v230
  %v328 = vadd.f32 %v327, 1.0
  %v329 = vmul.f32 %v328, %v230
  %v330 = vand.u32 2147483647, %v230
  %vm331 = vcmp.lt.f32.partialorder %v330, 0.0004427343
  %v332 = vsel %vm331, %v329, %v326
  %v333 = vadd.f32 %v232, 1.0
  %v334 = vlog2.pop %v333
  %v335 = vmul.f32 %v334, 0.6931472
  %v336 = vmul.f32 -0.5, %v232
  %v337 = vadd.f32 %v336, 1.0
  %v338 = vmul.f32 %v337, %v232
  %v339 = vand.u32 2147483647, %v232
  %vm340 = vcmp.lt.f32.partialorder %v339, 0.0004427343
  %v341 = vsel %vm340, %v338, %v335
  %v342 = vadd.f32 %v234, 1.0
  %v343 = vlog2.pop %v342
  %v344 = vmul.f32 %v343, 0.6931472
  %v345 = vmul.f32 -0.5, %v234
  %v346 = vadd.f32 %v345, 1.0
  %v347 = vmul.f32 %v346, %v234
  %v348 = vand.u32 2147483647, %v234
  %vm349 = vcmp.lt.f32.partialorder %v348, 0.0004427343
  %v350 = vsel %vm349, %v347, %v344
  %v351 = vadd.f32 %v236, 1.0
  %v352 = vlog2.pop %v351
  %v353 = vmul.f32 %v352, 0.6931472
  %v354 = vmul.f32 -0.5, %v236
  %v355 = vadd.f32 %v354, 1.0
  %v356 = vmul.f32 %v355, %v236
  %v357 = vand.u32 2147483647, %v236
  %vm358 = vcmp.lt.f32.partialorder %v357, 0.0004427343
  %v359 = vsel %vm358, %v356, %v353
  %v360 = vadd.f32 %v238, 1.0
  %v361 = vlog2.pop %v360
  %v362 = vmul.f32 %v361, 0.6931472
  %v363 = vmul.f32 -0.5, %v238
  %v364 = vadd.f32 %v363, 1.0
  %v365 = vmul.f32 %v364, %v238
  %v366 = vand.u32 2147483647, %v238
  %vm367 = vcmp.lt.f32.partialorder %v366, 0.0004427343
  %v368 = vsel %vm367, %v365, %v362
  %v369 = vadd.f32 %v240, 1.0
  %v370 = vlog2.pop %v369
  %v371 = vmul.f32 %v370, 0.6931472
  %v372 = vmul.f32 -0.5, %v240
  %v373 = vadd.f32 %v372, 1.0
  %v374 = vmul.f32 %v373, %v240
  %v375 = vand.u32 2147483647, %v240
  %vm376 = vcmp.lt.f32.partialorder %v375, 0.0004427343
  %v377 = vsel %vm376, %v374, %v371
  %v378 = vadd.f32 %v242, 1.0
  %v379 = vlog2.pop %v378
  %v380 = vmul.f32 %v379, 0.6931472
  %v381 = vmul.f32 -0.5, %v242
  %v382 = vadd.f32 %v381, 1.0
  %v383 = vmul.f32 %v382, %v242
  %v384 = vand.u32 2147483647, %v242
  %vm385 = vcmp.lt.f32.partialorder %v384, 0.0004427343
  %v386 = vsel %vm385, %v383, %v380
  %v387 = vadd.f32 %v163, %v251
  %v388 = vadd.f32 %v164, %v260
  %v389 = vadd.f32 %v165, %v269
  %v390 = vadd.f32 %v166, %v278
  %v391 = vadd.f32 %v167, %v287
  %v392 = vadd.f32 %v168, %v296
  %v393 = vadd.f32 %v169, %v305
  %v394 = vadd.f32 %v170, %v314
  %v395 = vadd.f32 %v171, %v323
  %v396 = vadd.f32 %v172, %v332
  %v397 = vadd.f32 %v173, %v341
  %v398 = vadd.f32 %v174, %v350
  %v399 = vadd.f32 %v175, %v359
  %v400 = vadd.f32 %v176, %v368
  %v401 = vadd.f32 %v177, %v377
  %v402 = vadd.f32 %v178, %v386
  %s403 = ssub.s32 2048, %s62
  %v404 = vstv %s403
  %vm405 = vcmp.lt.s32.totalorder %v83, %v404
  %vm406 = vcmp.lt.s32.totalorder %v84, %v404
  %vm407 = vcmp.lt.s32.totalorder %v85, %v404
  %vm408 = vcmp.lt.s32.totalorder %v86, %v404
  %vm409 = vcmp.lt.s32.totalorder %v87, %v404
  %vm410 = vcmp.lt.s32.totalorder %v88, %v404
  %vm411 = vcmp.lt.s32.totalorder %v89, %v404
  %vm412 = vcmp.lt.s32.totalorder %v90, %v404
  %vm413 = vcmp.lt.s32.totalorder %v91, %v404
  %vm414 = vcmp.lt.s32.totalorder %v92, %v404
  %vm415 = vcmp.lt.s32.totalorder %v93, %v404
  %vm416 = vcmp.lt.s32.totalorder %v94, %v404
  %vm417 = vcmp.lt.s32.totalorder %v95, %v404
  %vm418 = vcmp.lt.s32.totalorder %v96, %v404
  %vm419 = vcmp.lt.s32.totalorder %v97, %v404
  %vm420 = vcmp.lt.s32.totalorder %v98, %v404
  %v421 = vsel %vm405, %v387, 0.0
  %v422 = vsel %vm406, %v388, 0.0
  %v423 = vsel %vm407, %v389, 0.0
  %v424 = vsel %vm408, %v390, 0.0
  %v425 = vsel %vm409, %v391, 0.0
  %v426 = vsel %vm410, %v392, 0.0
  %v427 = vsel %vm411, %v393, 0.0
  %v428 = vsel %vm412, %v394, 0.0
  %v429 = vsel %vm413, %v395, 0.0
  %v430 = vsel %vm414, %v396, 0.0
  %v431 = vsel %vm415, %v397, 0.0
  %v432 = vsel %vm416, %v398, 0.0
  %v433 = vsel %vm417, %v399, 0.0
  %v434 = vsel %vm418, %v400, 0.0
  %v435 = vsel %vm419, %v401, 0.0
  %v436 = vsel %vm420, %v402, 0.0
  %v437 = vadd.f32 %v421, 0.0
  %v438 = vadd.f32 %v422, 0.0
  %v439 = vadd.f32 %v423, 0.0
  %v440 = vadd.f32 %v424, 0.0
  %v441 = vadd.f32 %v425, 0.0
  %v442 = vadd.f32 %v426, 0.0
  %v443 = vadd.f32 %v427, 0.0
  %v444 = vadd.f32 %v428, 0.0
  %v445 = vadd.f32 %v429, 0.0
  %v446 = vadd.f32 %v430, 0.0
  %v447 = vadd.f32 %v431, 0.0
  %v448 = vadd.f32 %v432, 0.0
  %v449 = vadd.f32 %v433, 0.0
  %v450 = vadd.f32 %v434, 0.0
  %v451 = vadd.f32 %v435, 0.0
  %v452 = vadd.f32 %v436, 0.0
  %v453 = vld [vmem:[#allocation2] sm:$0xff]
  %v454 = vadd.f32 %v437, %v438
  %v455 = vadd.f32 %v454, %v439
  %v456 = vadd.f32 %v455, %v440
  %v457 = vadd.f32 %v456, %v441
  %v458 = vadd.f32 %v457, %v442
  %v459 = vadd.f32 %v458, %v443
  %v460 = vadd.f32 %v459, %v444
  %v461 = vadd.f32 %v460, %v445
  %v462 = vadd.f32 %v461, %v446
  %v463 = vadd.f32 %v462, %v447
  %v464 = vadd.f32 %v463, %v448
  %v465 = vadd.f32 %v464, %v449
  %v466 = vadd.f32 %v465, %v450
  %v467 = vadd.f32 %v466, %v451
  %v468 = vadd.f32 %v467, %v452
  %469 = vadd.xlane.f32.xlu0 %v468
  %v470 = vpop.xlane.xlu0 %469
  %v471 = vadd.f32 %v453, %v470
  %vm472 = vcmask 7168
  %473 = vst.msk [vmem:[#allocation2] sm:$0xff] %vm472, %v471
  // Predicated region
  $region14: #{domain_bce_loss.1} parent=0 // pred_check
    %p474 = pneg %p55
  $region15: #{domain_bce_loss.1} parent=0 // pred_check_branch
    %476 = sbr.rel (%p474) target = $region17
  $region16: #{domain_bce_loss.1} parent=0 // pred_region
    %v477 = vld [vmem:[#allocation2] sm:$0xff]
    %479 = vset.pattern.permute.xlu0 0
    %480 = vperm.xlu0 %479, %v477
    %v481 = vpop.permute.xlu0 %480
    %483 = vst [vmem:[%s2] sm:$0xff] %v481
  $region17: #{domain_bce_loss.1} parent=0 // pred_fallthru
    _
  // Predicated region
  $region18: #{domain_bce_loss.1} parent=0 // pred_check
    _
  $region19: #{domain_bce_loss.1} parent=0 // pred_check_branch
    %485 = sbr.rel (0) target = $region21
  $region20: #{domain_bce_loss.1} parent=0 // pred_region
    _
  $region21: #{domain_bce_loss.1} parent=0 // pred_fallthru
    _
  // Predicated region
  $region22: #{domain_bce_loss.1} parent=0 // pred_check
    _
  $region23: #{domain_bce_loss.1} parent=0 // pred_check_branch
    %487 = sbr.rel (0) target = $region25
  $region24: #{domain_bce_loss.1} parent=0 // pred_region
    _
  $region25: #{domain_bce_loss.1} parent=0 // pred_fallthru
    _

</llo_original>
